<compile_context>
chip_gen: v5e
topology: v5e:2x2
jax: 0.10.0
libtpu: 0.0.40
codegen_flags: <defaults>
</compile_context>

<pallas_src>
import functools
from typing import NamedTuple, Optional

import jax
import jax.numpy as jnp
from jax import lax
from jax.experimental import pallas as pl
from jax.experimental.pallas import tpu as pltpu


class Output(NamedTuple):
    logits: Optional[jax.Array]
    loss: Optional[jax.Array]


_NEG_BIG = -1.0e30  # effective -inf for masked (past-vocab) columns in the CE


def _round_up(x: int, m: int) -> int:
    return (x + m - 1) // m * m


def _vmem_budget_bytes() -> int:
    """VMEM budget with headroom, derived from the actual chip capacity."""
    cap = 64 * 1024 * 1024  # conservative fallback (v7x per-TC capacity)
    try:
        cap = int(pltpu.get_tpu_info().vmem_capacity_bytes)
    except Exception:
        pass
    # ~75% of capacity, and always leave >= 8 MiB for compiler scratch.
    return max(32 * 1024 * 1024, min((cap * 3) // 4, cap - 8 * 1024 * 1024))


def _vmem_footprint(tb: int, tn: int, d: int, mm_bytes: int, out_bytes: int,
                    with_logits: bool, with_loss: bool) -> int:
    """Approximate double-buffered per-step VMEM footprint in bytes."""
    f = 2 * tb * d * mm_bytes            # x tiles
    f += 2 * tn * d * mm_bytes           # weight tiles
    f += 2 * tn * 4                      # bias tiles (f32)
    if with_logits:
        f += 2 * tb * tn * out_bytes     # logits tiles
    if with_loss:
        f += 2 * tb * 4                  # center-id tiles
        f += 2 * tb * 4                  # loss tiles
        f += 3 * tb * 4                  # m / l / picked scratch
    return f


def _choose_tiles(B, V, D, mm_bytes, out_bytes, with_logits, with_loss,
                  tile_b, tile_n, budget):
    """Pick (TB, TN).  Prefer a single batch tile (weight streamed once) and a
    big vocab tile (amortize ~0.35us per-step overhead), shrinking only if the
    double-buffered footprint would exceed the VMEM budget."""
    if tile_n is None:
        tile_n = min(_round_up(V, 128), 2048)
    else:
        tile_n = min(_round_up(tile_n, 128), _round_up(V, 128))
    if tile_b is None:
        tile_b = _round_up(B, 8)
    else:
        tile_b = min(_round_up(tile_b, 8), _round_up(B, 8))

    def fp(tb, tn):
        return _vmem_footprint(tb, tn, D, mm_bytes, out_bytes,
                               with_logits, with_loss)

    # Shrink the vocab tile first (only costs per-step overhead), keep the
    # batch tile big (each extra batch tile re-streams the whole weight).
    while fp(tile_b, tile_n) > budget and (tile_n > 512 or tile_b > 8):
        if tile_n > 512:
            tile_n = max(128, _round_up(tile_n // 2, 128))
        else:
            tile_b = max(8, _round_up(tile_b // 2, 8))
    while fp(tile_b, tile_n) > budget and tile_n > 128:
        tile_n = max(128, _round_up(tile_n // 2, 128))
    return tile_b, tile_n


# ---------------------------------------------------------------------------
# Kernels
# ---------------------------------------------------------------------------

def _matmul_bias(x_ref, w_ref, b_ref):
    # x_ref: (TB, D), w_ref: (TN, D) in native nn.Linear layout -> contract D.
    return lax.dot_general(
        x_ref[...], w_ref[...],
        dimension_numbers=(((1,), (1,)), ((), ())),
        preferred_element_type=jnp.float32) + b_ref[...]


def _online_ce_update(j, logits, v_total, ragged, ctr_ref, m_sc, l_sc, p_sc):
    """One vocab-tile update of the online cross-entropy accumulators."""
    @pl.when(j == 0)
    def _init():
        m_sc[...] = jnp.full_like(m_sc, -jnp.inf)
        l_sc[...] = jnp.zeros_like(l_sc)
        p_sc[...] = jnp.zeros_like(p_sc)

    tn = logits.shape[-1]
    col = lax.broadcasted_iota(jnp.int32, logits.shape, 1)  # local column ids
    if ragged:
        # The last vocab tile's DMA reads garbage rows past V; mask them.
        # Every tile has >= 1 real column (cdiv grid), so the running max
        # never stays at -inf.
        logits = jnp.where(col + j * tn < v_total, logits, _NEG_BIG)

    m_new = jnp.maximum(m_sc[...], jnp.max(logits, axis=-1, keepdims=True))
    alpha = jnp.exp(m_sc[...] - m_new)
    l_sc[...] = alpha * l_sc[...] + jnp.sum(jnp.exp(logits - m_new),
                                            axis=-1, keepdims=True)
    m_sc[...] = m_new

    # Picked logit: compare the local iota against the tile-local target index
    # (cheaper than building a global-index iota per tile).
    tgt_local = ctr_ref[...] - j * tn                    # (TB, 1) int32
    p_sc[...] += jnp.sum(jnp.where(col == tgt_local, logits, 0.0),
                         axis=-1, keepdims=True)


def _loss_logits_kernel(v_total, ragged, x_ref, w_ref, b_ref, ctr_ref,
                        logits_ref, loss_ref, m_sc, l_sc, p_sc):
    j = pl.program_id(1)
    logits = _matmul_bias(x_ref, w_ref, b_ref)
    logits_ref[...] = logits.astype(logits_ref.dtype)
    _online_ce_update(j, logits, v_total, ragged, ctr_ref, m_sc, l_sc, p_sc)

    @pl.when(j == pl.num_programs(1) - 1)
    def _finalize():
        loss_ref[...] = m_sc[...] + jnp.log(l_sc[...]) - p_sc[...]


def _loss_only_kernel(v_total, ragged, x_ref, w_ref, b_ref, ctr_ref,
                      loss_ref, m_sc, l_sc, p_sc):
    j = pl.program_id(1)
    logits = _matmul_bias(x_ref, w_ref, b_ref)
    _online_ce_update(j, logits, v_total, ragged, ctr_ref, m_sc, l_sc, p_sc)

    @pl.when(j == pl.num_programs(1) - 1)
    def _finalize():
        loss_ref[...] = m_sc[...] + jnp.log(l_sc[...]) - p_sc[...]


def _logits_kernel(x_ref, w_ref, b_ref, logits_ref):
    logits_ref[...] = _matmul_bias(x_ref, w_ref, b_ref).astype(logits_ref.dtype)


# ---------------------------------------------------------------------------
# Wrapper
# ---------------------------------------------------------------------------

@functools.partial(jax.jit,
                   static_argnames=("return_loss", "return_logits", "tile_b",
                                    "tile_n", "matmul_dtype", "logits_dtype",
                                    "w_buffers"))
def cbow_forward(params, centers, contexts, return_loss=True,
                 return_logits=True, tile_b=None, tile_n=None,
                 matmul_dtype=None, logits_dtype=jnp.float32, w_buffers=None):
    if not (return_loss or return_logits):
        raise ValueError("At least one of return_loss/return_logits required.")

    emb_table = params["embedding"]       # (V, D)
    w = params["linear_w"]                # (V, D)  native PyTorch Linear layout
    b = params["linear_b"]                # (V,)

    B, _C = contexts.shape
    V, D = emb_table.shape

    # Glue: embedding gather + context mean (kernel ingests (B, D), not (B,C,D)).
    x = emb_table[contexts].mean(axis=1)  # (B, D) f32

    if matmul_dtype is not None:
        mm = jnp.dtype(matmul_dtype)
        x = x.astype(mm)
        # For the full bandwidth win, store linear_w in matmul_dtype already;
        # this cast is then a no-op.
        w = w if w.dtype == mm else w.astype(mm)
    mm_bytes = x.dtype.itemsize
    out_bytes = jnp.dtype(logits_dtype).itemsize

    budget = _vmem_budget_bytes()
    tile_b, tile_n = _choose_tiles(B, V, D, mm_bytes, out_bytes,
                                   return_logits, return_loss,
                                   tile_b, tile_n, budget)

    # Only the tiny (B, D) activation and (B, 1) center ids get padded; the
    # weight, bias and logits are NOT padded (ragged last vocab tile handled
    # in-kernel / by partial block DMA).
    B_pad = _round_up(B, tile_b)
    if B_pad != B:
        x = jnp.pad(x, ((0, B_pad - B), (0, 0)))
    ctr = centers.astype(jnp.int32).reshape(B, 1)
    if B_pad != B:
        ctr = jnp.pad(ctr, ((0, B_pad - B), (0, 0)))
    b2 = b.reshape(1, V)

    grid = (B_pad // tile_b, pl.cdiv(V, tile_n))
    ragged_v = (V % tile_n) != 0

    x_spec = pl.BlockSpec((tile_b, D), lambda i, j: (i, 0))
    if w_buffers is None:
        w_spec = pl.BlockSpec((tile_n, D), lambda i, j: (j, 0))
    else:
        w_spec = pl.BlockSpec((tile_n, D), lambda i, j: (j, 0),
                              pipeline_mode=pl.Buffered(w_buffers))
    b_spec = pl.BlockSpec((1, tile_n), lambda i, j: (0, j))
    ctr_spec = pl.BlockSpec((tile_b, 1), lambda i, j: (i, 0))
    logits_spec = pl.BlockSpec((tile_b, tile_n), lambda i, j: (i, j))
    loss_spec = pl.BlockSpec((tile_b, 1), lambda i, j: (i, 0))

    logits_shape = jax.ShapeDtypeStruct((B_pad, V), logits_dtype)
    loss_shape = jax.ShapeDtypeStruct((B_pad, 1), jnp.float32)

    cp_reduce = pltpu.CompilerParams(
        dimension_semantics=("parallel", "arbitrary"),
        vmem_limit_bytes=budget)
    cp_parallel = pltpu.CompilerParams(
        dimension_semantics=("parallel", "parallel"),
        vmem_limit_bytes=budget)

    logits_p = None
    loss = None

    if return_loss:
        scratch = [pltpu.VMEM((tile_b, 1), jnp.float32),
                   pltpu.VMEM((tile_b, 1), jnp.float32),
                   pltpu.VMEM((tile_b, 1), jnp.float32)]
        if return_logits:
            kernel = functools.partial(_loss_logits_kernel, V, ragged_v)
            logits_p, loss_rows = pl.pallas_call(
                kernel, grid=grid,
                in_specs=[x_spec, w_spec, b_spec, ctr_spec],
                out_specs=(logits_spec, loss_spec),
                out_shape=(logits_shape, loss_shape),
                scratch_shapes=scratch,
                compiler_params=cp_reduce,
            )(x, w, b2, ctr)
        else:
            kernel = functools.partial(_loss_only_kernel, V, ragged_v)
            loss_rows = pl.pallas_call(
                kernel, grid=grid,
                in_specs=[x_spec, w_spec, b_spec, ctr_spec],
                out_specs=loss_spec,
                out_shape=loss_shape,
                scratch_shapes=scratch,
                compiler_params=cp_reduce,
            )(x, w, b2, ctr)
        loss = jnp.mean(loss_rows[:B, 0])
    else:
        logits_p = pl.pallas_call(
            _logits_kernel, grid=grid,
            in_specs=[x_spec, w_spec, b_spec],
            out_specs=logits_spec,
            out_shape=logits_shape,
            compiler_params=cp_parallel,
        )(x, w, b2)

    logits = None
    if return_logits:
        logits = logits_p if B_pad == B else logits_p[:B]
    return Output(logits=logits, loss=loss)


def _reference_forward(params, centers, contexts):
    """Pure-JAX reference mirroring the PyTorch module."""
    e_ctx = params["embedding"][contexts].mean(axis=1)            # (B, D)
    logits = e_ctx @ params["linear_w"].T + params["linear_b"]    # (B, V)
    logz = jax.nn.logsumexp(logits, axis=-1)
    picked = jnp.take_along_axis(logits, centers[:, None], axis=-1)[:, 0]
    return logits, jnp.mean(logz - picked)


if __name__ == "__main__":
    keys = jax.random.split(jax.random.PRNGKey(0), 10)

    # Shapes consistent with CBOW: batch=16, 2*window_size=6 context words,
    # embedding_dim=32, vocab_size=512.
    B, C, D, V = 16, 6, 32, 512
    params = {
        "embedding": jax.random.normal(keys[0], (V, D), jnp.float32),
        "linear_w": jax.random.normal(keys[1], (V, D), jnp.float32) * 0.05,
        "linear_b": jax.random.normal(keys[2], (V,), jnp.float32) * 0.01,
    }
    contexts = jax.random.randint(keys[3], (B, C), 0, V, dtype=jnp.int32)
    centers = jax.random.randint(keys[4], (B,), 0, V, dtype=jnp.int32)
    ref_logits, ref_loss = _reference_forward(params, centers, contexts)

    # 1) Forced small tiles -> multi-tile grid (2 batch x 4 vocab), f32.
    out = cbow_forward(params, centers, contexts, tile_b=8, tile_n=128)
    jax.block_until_ready(out)
    assert jnp.allclose(out.logits, ref_logits, atol=1e-4, rtol=1e-4)
    assert jnp.allclose(out.loss, ref_loss, atol=1e-4, rtol=1e-4)

    # 2) Default (VMEM-derived) tiles -> single batch tile, single vocab tile.
    out2 = cbow_forward(params, centers, contexts)
    jax.block_until_ready(out2)
    assert jnp.allclose(out2.logits, ref_logits, atol=1e-4, rtol=1e-4)
    assert jnp.allclose(out2.loss, ref_loss, atol=1e-4, rtol=1e-4)

    # 3) Loss-only (training path): the B x V logits writeback is skipped.
    out3 = cbow_forward(params, centers, contexts, return_logits=False,
                        tile_b=8, tile_n=128)
    jax.block_until_ready(out3.loss)
    assert out3.logits is None
    assert jnp.allclose(out3.loss, ref_loss, atol=1e-4, rtol=1e-4)

    # 4) Logits-only (inference path): no CE math, no loss output.
    out4 = cbow_forward(params, centers, contexts, return_loss=False,
                        tile_b=8, tile_n=128)
    jax.block_until_ready(out4.logits)
    assert out4.loss is None
    assert jnp.allclose(out4.logits, ref_logits, atol=1e-4, rtol=1e-4)

    # 5) Ragged shapes: vocab not a multiple of the tile, batch not a multiple
    #    of 8 -> exercises the in-kernel mask of the last vocab tile.
    B2, C2, V2 = 12, 4, 500
    params2 = {
        "embedding": jax.random.normal(keys[5], (V2, D), jnp.float32),
        "linear_w": jax.random.normal(keys[6], (V2, D), jnp.float32) * 0.05,
        "linear_b": jax.random.normal(keys[7], (V2,), jnp.float32) * 0.01,
    }
    contexts2 = jax.random.randint(keys[8], (B2, C2), 0, V2, dtype=jnp.int32)
    centers2 = jax.random.randint(keys[9], (B2,), 0, V2, dtype=jnp.int32)
    ref_logits2, ref_loss2 = _reference_forward(params2, centers2, contexts2)
    out5 = cbow_forward(params2, centers2, contexts2, tile_b=8, tile_n=128)
    jax.block_until_ready(out5)
    assert out5.logits.shape == (B2, V2)
    assert jnp.allclose(out5.logits, ref_logits2, atol=1e-4, rtol=1e-4)
    assert jnp.allclose(out5.loss, ref_loss2, atol=1e-4, rtol=1e-4)

    # 6) bf16 weight/activation streaming + bf16 logits output (CE stays f32).
    out6 = cbow_forward(params, centers, contexts,
                        matmul_dtype=jnp.bfloat16, logits_dtype=jnp.bfloat16)
    jax.block_until_ready(out6)
    assert out6.logits.dtype == jnp.bfloat16
    assert jnp.allclose(out6.logits.astype(jnp.float32), ref_logits,
                        atol=5e-2, rtol=5e-2)
    assert jnp.allclose(out6.loss, ref_loss, atol=5e-2, rtol=5e-2)

    print("KERNEL_OK")
</pallas_src>

<mosaic_0001>
module attributes {stable_mosaic.version = 11 : i64} {
  func.func @_loss_logits_kernel(%arg0: i32, %arg1: i32, %arg2: memref<8x32xf32, #tpu.memory_space<vmem>>, %arg3: memref<128x32xf32, #tpu.memory_space<vmem>>, %arg4: memref<1x128xf32, #tpu.memory_space<vmem>>, %arg5: memref<8x1xi32, #tpu.memory_space<vmem>>, %arg6: memref<8x128xf32, #tpu.memory_space<vmem>>, %arg7: memref<8x1xf32, #tpu.memory_space<vmem>>, %arg8: memref<8x1xf32, #tpu.memory_space<vmem>>, %arg9: memref<8x1xf32, #tpu.memory_space<vmem>>, %arg10: memref<8x1xf32, #tpu.memory_space<vmem>>) attributes {dimension_semantics = [#tpu.dimension_semantics<parallel>, #tpu.dimension_semantics<arbitrary>], iteration_bounds = array<i64: 2, 4>, scalar_prefetch = 0 : i64, scratch_operands = 3 : i64, tpu.core_type = #tpu.core_type<tc>, window_params = [{transform_indices = @transform_0, window_bounds = array<i64: 8, 32>}, {transform_indices = @transform_1, window_bounds = array<i64: 128, 32>}, {transform_indices = @transform_2, window_bounds = array<i64: 1, 128>}, {transform_indices = @transform_3, window_bounds = array<i64: 8, 1>}, {transform_indices = @transform_4, window_bounds = array<i64: 8, 128>}, {transform_indices = @transform_5, window_bounds = array<i64: 8, 1>}]} {
    %c0 = arith.constant 0 : index
    %c0_0 = arith.constant 0 : index
    %0 = vector.load %arg2[%c0, %c0_0] : memref<8x32xf32, #tpu.memory_space<vmem>>, vector<8x32xf32>
    %c0_1 = arith.constant 0 : index
    %c0_2 = arith.constant 0 : index
    %1 = vector.load %arg3[%c0_1, %c0_2] : memref<128x32xf32, #tpu.memory_space<vmem>>, vector<128x32xf32>
    %cst = arith.constant dense<0.000000e+00> : vector<8x128xf32>
    %2 = tpu.matmul %0, %1, %cst {dimension_numbers = #tpu.dot_dimension_numbers<[1], [1], [0], [0], [0, 0, 1, 0], [], []>} : vector<8x32xf32>, vector<128x32xf32>, vector<8x128xf32> -> vector<8x128xf32>
    %c0_3 = arith.constant 0 : index
    %c0_4 = arith.constant 0 : index
    %3 = vector.load %arg4[%c0_3, %c0_4] : memref<1x128xf32, #tpu.memory_space<vmem>>, vector<1x128xf32>
    %4 = vector.broadcast %3 : vector<1x128xf32> to vector<8x128xf32>
    %5 = arith.addf %2, %4 : vector<8x128xf32>
    %c0_5 = arith.constant 0 : index
    %c0_6 = arith.constant 0 : index
    %6 = vector.load %arg6[%c0_5, %c0_6] : memref<8x128xf32, #tpu.memory_space<vmem>>, vector<8x128xf32>
    tpu.vector_store %arg6[%c0_5, %c0_6], %5 {strides = array<i32>} : memref<8x128xf32, #tpu.memory_space<vmem>>, vector<8x128xf32>,
    %c0_i32 = arith.constant 0 : i32
    %7 = arith.cmpi eq, %arg1, %c0_i32 : i32
    %8 = arith.extui %7 : i1 to i32
    %c0_i32_7 = arith.constant 0 : i32
    %9 = arith.cmpi ne, %8, %c0_i32_7 : i32
    scf.if %9 {
      %cst_29 = arith.constant 0xFF800000 : f32
      %44 = vector.broadcast %cst_29 : f32 to vector<8x1xf32>
      %c0_30 = arith.constant 0 : index
      %c0_31 = arith.constant 0 : index
      %45 = vector.load %arg8[%c0_30, %c0_31] : memref<8x1xf32, #tpu.memory_space<vmem>>, vector<8x1xf32>
      tpu.vector_store %arg8[%c0_30, %c0_31], %44 {strides = array<i32>} : memref<8x1xf32, #tpu.memory_space<vmem>>, vector<8x1xf32>,
      %cst_32 = arith.constant 0.000000e+00 : f32
      %46 = vector.broadcast %cst_32 : f32 to vector<8x1xf32>
      %c0_33 = arith.constant 0 : index
      %c0_34 = arith.constant 0 : index
      %47 = vector.load %arg9[%c0_33, %c0_34] : memref<8x1xf32, #tpu.memory_space<vmem>>, vector<8x1xf32>
      tpu.vector_store %arg9[%c0_33, %c0_34], %46 {strides = array<i32>} : memref<8x1xf32, #tpu.memory_space<vmem>>, vector<8x1xf32>,
      %cst_35 = arith.constant 0.000000e+00 : f32
      %48 = vector.broadcast %cst_35 : f32 to vector<8x1xf32>
      %c0_36 = arith.constant 0 : index
      %c0_37 = arith.constant 0 : index
      %49 = vector.load %arg10[%c0_36, %c0_37] : memref<8x1xf32, #tpu.memory_space<vmem>>, vector<8x1xf32>
      tpu.vector_store %arg10[%c0_36, %c0_37], %48 {strides = array<i32>} : memref<8x1xf32, #tpu.memory_space<vmem>>, vector<8x1xf32>,
    } else {
    }
    %10 = tpu.iota {dimensions = array<i32: 1>} : vector<8x128xi32>
    %c0_8 = arith.constant 0 : index
    %c0_9 = arith.constant 0 : index
    %11 = vector.load %arg8[%c0_8, %c0_9] : memref<8x1xf32, #tpu.memory_space<vmem>>, vector<8x1xf32>
    %cst_10 = arith.constant dense<0xFF800000> : vector<8xf32>
    %12 = vector.multi_reduction <maximumf>, %5, %cst_10 [1] : vector<8x128xf32> to vector<8xf32>
    %13 = vector.shape_cast %12 : vector<8xf32> to vector<8x1xf32>
    %14 = arith.maximumf %11, %13 : vector<8x1xf32>
    %c0_11 = arith.constant 0 : index
    %c0_12 = arith.constant 0 : index
    %15 = vector.load %arg8[%c0_11, %c0_12] : memref<8x1xf32, #tpu.memory_space<vmem>>, vector<8x1xf32>
    %16 = arith.subf %15, %14 : vector<8x1xf32>
    %17 = math.exp %16 : vector<8x1xf32>
    %c0_13 = arith.constant 0 : index
    %c0_14 = arith.constant 0 : index
    %18 = vector.load %arg9[%c0_13, %c0_14] : memref<8x1xf32, #tpu.memory_space<vmem>>, vector<8x1xf32>
    %19 = arith.mulf %17, %18 : vector<8x1xf32>
    %20 = vector.broadcast %14 : vector<8x1xf32> to vector<8x128xf32>
    %21 = arith.subf %5, %20 : vector<8x128xf32>
    %22 = math.exp %21 : vector<8x128xf32>
    %cst_15 = arith.constant dense<0.000000e+00> : vector<8xf32>
    %23 = vector.multi_reduction <add>, %22, %cst_15 [1] : vector<8x128xf32> to vector<8xf32>
    %24 = vector.shape_cast %23 : vector<8xf32> to vector<8x1xf32>
    %25 = arith.addf %19, %24 : vector<8x1xf32>
    %c0_16 = arith.constant 0 : index
    %c0_17 = arith.constant 0 : index
    %26 = vector.load %arg9[%c0_16, %c0_17] : memref<8x1xf32, #tpu.memory_space<vmem>>, vector<8x1xf32>
    tpu.vector_store %arg9[%c0_16, %c0_17], %25 {strides = array<i32>} : memref<8x1xf32, #tpu.memory_space<vmem>>, vector<8x1xf32>,
    %c0_18 = arith.constant 0 : index
    %c0_19 = arith.constant 0 : index
    %27 = vector.load %arg8[%c0_18, %c0_19] : memref<8x1xf32, #tpu.memory_space<vmem>>, vector<8x1xf32>
    tpu.vector_store %arg8[%c0_18, %c0_19], %14 {strides = array<i32>} : memref<8x1xf32, #tpu.memory_space<vmem>>, vector<8x1xf32>,
    %c0_20 = arith.constant 0 : index
    %c0_21 = arith.constant 0 : index
    %28 = vector.load %arg5[%c0_20, %c0_21] : memref<8x1xi32, #tpu.memory_space<vmem>>, vector<8x1xi32>
    %c128_i32 = arith.constant 128 : i32
    %29 = arith.muli %arg1, %c128_i32 : i32
    %30 = vector.broadcast %29 : i32 to vector<8x1xi32>
    %31 = arith.subi %28, %30 : vector<8x1xi32>
    %c0_22 = arith.constant 0 : index
    %c0_23 = arith.constant 0 : index
    %32 = vector.load %arg10[%c0_22, %c0_23] : memref<8x1xf32, #tpu.memory_space<vmem>>, vector<8x1xf32>
    %33 = vector.broadcast %31 : vector<8x1xi32> to vector<8x128xi32>
    %34 = arith.cmpi eq, %10, %33 : vector<8x128xi32>
    %cst_24 = arith.constant 0.000000e+00 : f32
    %35 = vector.broadcast %cst_24 : f32 to vector<8x128xf32>
    %36 = arith.select %34, %5, %35 : vector<8x128xi1>, vector<8x128xf32>
    %cst_25 = arith.constant dense<0.000000e+00> : vector<8xf32>
    %37 = vector.multi_reduction <add>, %36, %cst_25 [1] : vector<8x128xf32> to vector<8xf32>
    %38 = vector.shape_cast %37 : vector<8xf32> to vector<8x1xf32>
    %39 = arith.addf %32, %38 : vector<8x1xf32>
    %c0_26 = arith.constant 0 : index
    %c0_27 = arith.constant 0 : index
    %40 = vector.load %arg10[%c0_26, %c0_27] : memref<8x1xf32, #tpu.memory_space<vmem>>, vector<8x1xf32>
    tpu.vector_store %arg10[%c0_26, %c0_27], %39 {strides = array<i32>} : memref<8x1xf32, #tpu.memory_space<vmem>>, vector<8x1xf32>,
    %c3_i32 = arith.constant 3 : i32
    %41 = arith.cmpi eq, %arg1, %c3_i32 : i32
    %42 = arith.extui %41 : i1 to i32
    %c0_i32_28 = arith.constant 0 : i32
    %43 = arith.cmpi ne, %42, %c0_i32_28 : i32
    scf.if %43 {
      %c0_29 = arith.constant 0 : index
      %c0_30 = arith.constant 0 : index
      %44 = vector.load %arg8[%c0_29, %c0_30] : memref<8x1xf32, #tpu.memory_space<vmem>>, vector<8x1xf32>
      %c0_31 = arith.constant 0 : index
      %c0_32 = arith.constant 0 : index
      %45 = vector.load %arg9[%c0_31, %c0_32] : memref<8x1xf32, #tpu.memory_space<vmem>>, vector<8x1xf32>
      %46 = math.log %45 : vector<8x1xf32>
      %47 = arith.addf %44, %46 : vector<8x1xf32>
      %c0_33 = arith.constant 0 : index
      %c0_34 = arith.constant 0 : index
      %48 = vector.load %arg10[%c0_33, %c0_34] : memref<8x1xf32, #tpu.memory_space<vmem>>, vector<8x1xf32>
      %49 = arith.subf %47, %48 : vector<8x1xf32>
      %c0_35 = arith.constant 0 : index
      %c0_36 = arith.constant 0 : index
      %50 = vector.load %arg7[%c0_35, %c0_36] : memref<8x1xf32, #tpu.memory_space<vmem>>, vector<8x1xf32>
      tpu.vector_store %arg7[%c0_35, %c0_36], %49 {strides = array<i32>} : memref<8x1xf32, #tpu.memory_space<vmem>>, vector<8x1xf32>,
    } else {
    }
    return
  }
  func.func @transform_0(%arg0: i32, %arg1: i32) -> (i32, i32) {
    %c0_i32 = arith.constant 0 : i32
    %c0_i32_0 = arith.constant 0 : i32
    return %arg0, %c0_i32 : i32, i32
  }
  func.func @transform_1(%arg0: i32, %arg1: i32) -> (i32, i32) {
    %c0_i32 = arith.constant 0 : i32
    %c0_i32_0 = arith.constant 0 : i32
    return %arg1, %c0_i32 : i32, i32
  }
  func.func @transform_2(%arg0: i32, %arg1: i32) -> (i32, i32) {
    %c0_i32 = arith.constant 0 : i32
    %c0_i32_0 = arith.constant 0 : i32
    return %c0_i32, %arg1 : i32, i32
  }
  func.func @transform_3(%arg0: i32, %arg1: i32) -> (i32, i32) {
    %c0_i32 = arith.constant 0 : i32
    %c0_i32_0 = arith.constant 0 : i32
    return %arg0, %c0_i32 : i32, i32
  }
  func.func @transform_4(%arg0: i32, %arg1: i32) -> (i32, i32) {
    %c0_i32 = arith.constant 0 : i32
    return %arg0, %arg1 : i32, i32
  }
  func.func @transform_5(%arg0: i32, %arg1: i32) -> (i32, i32) {
    %c0_i32 = arith.constant 0 : i32
    %c0_i32_0 = arith.constant 0 : i32
    return %arg0, %c0_i32 : i32, i32
  }
}

</mosaic_0001>

<llo_original>
// kernel: cbow_forward.1
$region0: #{cbow_forward.1}
  #allocation0 [shape = 'u32[]', space=smem, size = 0x4, offset = 0x4, fixed_abs, tag = 'smem constant byte address 0x4 - core index']
  #allocation1 [shape = 'u32[72,128]{1,0:T(1,128)}', space=vmem, size = 0x9000, scoped, tag = 'internal scratch']
  #allocation2 [shape = 'f32[8,1]{1,0:T(8,128)}', space=vmem, size = 0x1000, scoped, tag = 'scratch operand']
  #allocation3 [shape = 'f32[8,1]{1,0:T(8,128)}', space=vmem, size = 0x1000, scoped, tag = 'scratch operand']
  #allocation4 [shape = 'f32[8,1]{1,0:T(8,128)}', space=vmem, size = 0x1000, scoped, tag = 'scratch operand']
  %s0 = inlined_call_operand.vmem [shape: f32[16,32], index: 0, kind: input, shape index: {}]
  %s1 = inlined_call_operand.vmem [shape: f32[512,32], index: 1, kind: input, shape index: {}]
  %s2 = inlined_call_operand.vmem [shape: f32[1,512], index: 2, kind: input, shape index: {}]
  %s3 = inlined_call_operand.vmem [shape: s32[16,1], index: 3, kind: input, shape index: {}]
  %s4 = inlined_call_operand.hbm [shape: f32[16,512], index: 4, kind: output, shape index: {0}]
  %s5 = inlined_call_operand.vmem [shape: f32[16,1], index: 5, kind: output, shape index: {1}]
  %6 = xla_tuple %s4, %s5
  %s7 = sld [smem:[#allocation0]]
  $region65: #{cbow_forward.1} parent=0
    _
  %s9 = ssub.s32 1, %s7
  %s10 = scalar_select 0, %s9, %s7
  $region1: #{cbow_forward.1} parent=0
    #allocation5 [shape = 'u8[8192]{0}', space=vmem, size = 0x2000, scoped, tag = 'output window, operand 0']
    #allocation6 [shape = 's32[2]{0}', space=sflag, size = 0x8, scoped, tag = 'scoped memory for cbow_forward.1']
    %11 = vsyncpa [#allocation6], 0
    %s12 = scalar_lea.sflag [#allocation6], 1
    %13 = vsyncpa %s12, 0
    loop: start=0, step=1, limit=10
    $region2: #{cbow_forward.1} parent=1 // loop_pre_header
      _
    $region3: #{cbow_forward.1} parent=1 // loop_header
      %s15 = sphi 0, %s19
      %p16 = scmp.ge.s32.totalorder %s15, 10
      %s22 = sphi 0, %s34
      %s23 = sphi 0, %s30
      %s24 = sphi 0, %s22
      %s25 = sphi 0, %s23
      %s26 = sphi 0, %s24
      %s27 = sphi 0, %s25
      %s37 = sphi 0, %s39
      %s40 = sphi 0, %s37
      %s41 = sphi 0, %s40
      %s57 = sphi 0, %s41
      %s63 = sphi 0, %s65
      %s66 = sphi 0, %s63
      %s67 = sphi 0, %s66
      %s83 = sphi 0, %s67
      %s89 = sphi 0, %s91
      %s92 = sphi 0, %s89
      %s93 = sphi 0, %s92
      %s109 = sphi 0, %s93
      %s115 = sphi 0, %s117
      %s118 = sphi 0, %s115
      %s119 = sphi 0, %s118
      %s135 = sphi 0, %s119
      %s143 = sphi 0, %s145
      %s146 = sphi 0, %s143
      %s147 = sphi 0, %s146
      %s163 = sphi 0, %s147
      %s169 = sphi 0, %s171
      %s172 = sphi 0, %s169
      %s173 = sphi 0, %s172
      %s189 = sphi 0, %s173
    $region4: #{cbow_forward.1} parent=1 // loop_header_branch
      %18 = sbr.rel (%p16) target = $region8
    $region5: #{cbow_forward.1} parent=1 // loop_body
      %s20 = ssub.s32 %s15, 1
      %s21 = ssub.s32 %s15, 2
      %s28 = sadd.s32 1, %s23
      %p29 = scmp.ge.s32.totalorder %s28, 4
      %s30 = scalar_select %p29, 0, %s28
      %s31 = sadd.s32 1, %s22
      %s32 = scalar_select %p29, %s31, %s22
      %p33 = scmp.ge.s32.totalorder %s32, 2
      %s34 = scalar_select %p33, 0, %s32
      %s35 = ssub.s32 %s22, %s34
      %p36 = scmp.eq.s32.totalorder %s35, 0
      %s38 = sadd.s32 %s37, 1
      %s39 = scalar_select %p36, %s37, %s38
      %p42 = pneg %p36
      %p43 = scmp.eq.s32.totalorder %s15, 7
      %p44 = por %p42, %p43
      %p45 = scmp.ne.s32.totalorder %s37, %s40
      %p46 = scmp.eq.s32.totalorder %s15, 0
      %p47 = por %p45, %p46
      %p48 = scmp.ne.s32.totalorder %s37, %s40
      %p49 = scmp.eq.s32.totalorder %s20, 7
      %p50 = por %p48, %p49
      %p51 = scmp.ne.s32.totalorder %s40, %s41
      %p52 = scmp.eq.s32.totalorder %s20, 0
      %p53 = por %p51, %p52
      %p54 = scmp.ne.s32.totalorder %s40, %s41
      %p55 = scmp.eq.s32.totalorder %s21, 7
      %p56 = por %p54, %p55
      %p58 = scmp.ne.s32.totalorder %s41, %s57
      %p59 = scmp.eq.s32.totalorder %s21, 0
      %p60 = por %p58, %p59
      %s61 = ssub.s32 %s23, %s30
      %p62 = scmp.eq.s32.totalorder %s61, 0
      %s64 = sadd.s32 %s63, 1
      %s65 = scalar_select %p62, %s63, %s64
      %p68 = pneg %p62
      %p69 = scmp.eq.s32.totalorder %s15, 7
      %p70 = por %p68, %p69
      %p71 = scmp.ne.s32.totalorder %s63, %s66
      %p72 = scmp.eq.s32.totalorder %s15, 0
      %p73 = por %p71, %p72
      %p74 = scmp.ne.s32.totalorder %s63, %s66
      %p75 = scmp.eq.s32.totalorder %s20, 7
      %p76 = por %p74, %p75
      %p77 = scmp.ne.s32.totalorder %s66, %s67
      %p78 = scmp.eq.s32.totalorder %s20, 0
      %p79 = por %p77, %p78
      %p80 = scmp.ne.s32.totalorder %s66, %s67
      %p81 = scmp.eq.s32.totalorder %s21, 7
      %p82 = por %p80, %p81
      %p84 = scmp.ne.s32.totalorder %s67, %s83
      %p85 = scmp.eq.s32.totalorder %s21, 0
      %p86 = por %p84, %p85
      %s87 = ssub.s32 %s23, %s30
      %p88 = scmp.eq.s32.totalorder %s87, 0
      %s90 = sadd.s32 %s89, 1
      %s91 = scalar_select %p88, %s89, %s90
      %p94 = pneg %p88
      %p95 = scmp.eq.s32.totalorder %s15, 7
      %p96 = por %p94, %p95
      %p97 = scmp.ne.s32.totalorder %s89, %s92
      %p98 = scmp.eq.s32.totalorder %s15, 0
      %p99 = por %p97, %p98
      %p100 = scmp.ne.s32.totalorder %s89, %s92
      %p101 = scmp.eq.s32.totalorder %s20, 7
      %p102 = por %p100, %p101
      %p103 = scmp.ne.s32.totalorder %s92, %s93
      %p104 = scmp.eq.s32.totalorder %s20, 0
      %p105 = por %p103, %p104
      %p106 = scmp.ne.s32.totalorder %s92, %s93
      %p107 = scmp.eq.s32.totalorder %s21, 7
      %p108 = por %p106, %p107
      %p110 = scmp.ne.s32.totalorder %s93, %s109
      %p111 = scmp.eq.s32.totalorder %s21, 0
      %p112 = por %p110, %p111
      %s113 = ssub.s32 %s22, %s34
      %p114 = scmp.eq.s32.totalorder %s113, 0
      %s116 = sadd.s32 %s115, 1
      %s117 = scalar_select %p114, %s115, %s116
      %p120 = pneg %p114
      %p121 = scmp.eq.s32.totalorder %s15, 7
      %p122 = por %p120, %p121
      %p123 = scmp.ne.s32.totalorder %s115, %s118
      %p124 = scmp.eq.s32.totalorder %s15, 0
      %p125 = por %p123, %p124
      %p126 = scmp.ne.s32.totalorder %s115, %s118
      %p127 = scmp.eq.s32.totalorder %s20, 7
      %p128 = por %p126, %p127
      %p129 = scmp.ne.s32.totalorder %s118, %s119
      %p130 = scmp.eq.s32.totalorder %s20, 0
      %p131 = por %p129, %p130
      %p132 = scmp.ne.s32.totalorder %s118, %s119
      %p133 = scmp.eq.s32.totalorder %s21, 7
      %p134 = por %p132, %p133
      %p136 = scmp.ne.s32.totalorder %s119, %s135
      %p137 = scmp.eq.s32.totalorder %s21, 0
      %p138 = por %p136, %p137
      %s139 = ssub.s32 %s22, %s34
      %s140 = ssub.s32 %s23, %s30
      %s141 = sor.u32 %s139, %s140
      %p142 = scmp.eq.s32.totalorder %s141, 0
      %s144 = sadd.s32 %s143, 1
      %s145 = scalar_select %p142, %s143, %s144
      %p148 = pneg %p142
      %p149 = scmp.eq.s32.totalorder %s15, 7
      %p150 = por %p148, %p149
      %p151 = scmp.ne.s32.totalorder %s143, %s146
      %p152 = scmp.eq.s32.totalorder %s15, 0
      %p153 = por %p151, %p152
      %p154 = scmp.ne.s32.totalorder %s143, %s146
      %p155 = scmp.eq.s32.totalorder %s20, 7
      %p156 = por %p154, %p155
      %p157 = scmp.ne.s32.totalorder %s146, %s147
      %p158 = scmp.eq.s32.totalorder %s20, 0
      %p159 = por %p157, %p158
      %p160 = scmp.ne.s32.totalorder %s146, %s147
      %p161 = scmp.eq.s32.totalorder %s21, 7
      %p162 = por %p160, %p161
      %p164 = scmp.ne.s32.totalorder %s147, %s163
      %p165 = scmp.eq.s32.totalorder %s21, 0
      %p166 = por %p164, %p165
      %s167 = ssub.s32 %s22, %s34
      %p168 = scmp.eq.s32.totalorder %s167, 0
      %s170 = sadd.s32 %s169, 1
      %s171 = scalar_select %p168, %s169, %s170
      %p174 = pneg %p168
      %p175 = scmp.eq.s32.totalorder %s15, 7
      %p176 = por %p174, %p175
      %p177 = scmp.ne.s32.totalorder %s169, %s172
      %p178 = scmp.eq.s32.totalorder %s15, 0
      %p179 = por %p177, %p178
      %p180 = scmp.ne.s32.totalorder %s169, %s172
      %p181 = scmp.eq.s32.totalorder %s20, 7
      %p182 = por %p180, %p181
      %p183 = scmp.ne.s32.totalorder %s172, %s173
      %p184 = scmp.eq.s32.totalorder %s20, 0
      %p185 = por %p183, %p184
      %p186 = scmp.ne.s32.totalorder %s172, %s173
      %p187 = scmp.eq.s32.totalorder %s21, 7
      %p188 = por %p186, %p187
      %p190 = scmp.ne.s32.totalorder %s173, %s189
      %p191 = scmp.eq.s32.totalorder %s21, 0
      %p192 = por %p190, %p191
      %p193 = scmp.le.s32.totalorder 1, %s15
      %p194 = scmp.lt.s32.totalorder %s15, 9
      %p195 = pnand %p193, %p194
      %p196 = pneg %p195
      // Predicated region
      $region9: #{cbow_forward.1} parent=5 // pred_check
        _
      $region10: #{cbow_forward.1} parent=5 // pred_check_branch
        %198 = sbr.rel (%p195) target = $region12
      $region11: #{cbow_forward.1} parent=5 // pred_region
        %s199 = ssub.s32 %s15, 1
      $region12: #{cbow_forward.1} parent=5 // pred_fallthru
        _
      %p200 = scmp.lt.s32.totalorder %s15, 8
      // Predicated region
      $region13: #{cbow_forward.1} parent=5 // pred_check
        %p201 = pneg %p200
      $region14: #{cbow_forward.1} parent=5 // pred_check_branch
        %203 = sbr.rel (%p201) target = $region16
      $region15: #{cbow_forward.1} parent=5 // pred_region
        // Predicated region
        $region17: #{cbow_forward.1} parent=15 // pred_check
          %p204 = pneg %p47
        $region18: #{cbow_forward.1} parent=15 // pred_check_branch
          %206 = sbr.rel (%p204) target = $region20
        $region19: #{cbow_forward.1} parent=15 // pred_region
          %p207 = scmp.lt.s32.totalorder %s22, 1
          %s208 = scalar_select %p207, %s22, 1
          %s209 = smul.addr %s208, 8
          %s210 = scalar_lea.vmem %s0, %s209
        $region20: #{cbow_forward.1} parent=15 // pred_fallthru
          _
        // Predicated region
        $region21: #{cbow_forward.1} parent=15 // pred_check
          %p211 = pneg %p73
        $region22: #{cbow_forward.1} parent=15 // pred_check_branch
          %213 = sbr.rel (%p211) target = $region24
        $region23: #{cbow_forward.1} parent=15 // pred_region
          %s214 = smul.u32 16, %s23
          %p215 = scmp.lt.s32.totalorder %s214, 63
          %s216 = scalar_select %p215, %s214, 63
          %s217 = smul.addr %s216, 8
          %s218 = scalar_lea.vmem %s1, %s217
          %s219 = smul.u32 16, %s23
        $region24: #{cbow_forward.1} parent=15 // pred_fallthru
          _
        // Predicated region
        $region25: #{cbow_forward.1} parent=15 // pred_check
          %p220 = pneg %p99
        $region26: #{cbow_forward.1} parent=15 // pred_check_branch
          %222 = sbr.rel (%p220) target = $region28
        $region27: #{cbow_forward.1} parent=15 // pred_region
          %p223 = scmp.lt.s32.totalorder %s23, 3
          %s224 = scalar_select %p223, %s23, 3
          %s225 = scalar_lea.vmem %s2, %s224
        $region28: #{cbow_forward.1} parent=15 // pred_fallthru
          _
        // Predicated region
        $region29: #{cbow_forward.1} parent=15 // pred_check
          %p226 = pneg %p125
        $region30: #{cbow_forward.1} parent=15 // pred_check_branch
          %228 = sbr.rel (%p226) target = $region32
        $region31: #{cbow_forward.1} parent=15 // pred_region
          %p229 = scmp.lt.s32.totalorder %s22, 1
          %s230 = scalar_select %p229, %s22, 1
          %s231 = smul.addr %s230, 8
          %s232 = scalar_lea.vmem %s3, %s231
        $region32: #{cbow_forward.1} parent=15 // pred_fallthru
          _
      $region16: #{cbow_forward.1} parent=5 // pred_fallthru
        _
      %p233 = scmp.le.s32.totalorder 1, %s15
      %p234 = scmp.lt.s32.totalorder %s15, 9
      %p235 = pnand %p233, %p234
      %p236 = pneg %p235
      // Predicated region
      $region33: #{cbow_forward.1} parent=5 // pred_check
        _
      $region34: #{cbow_forward.1} parent=5 // pred_check_branch
        %238 = sbr.rel (%p235) target = $region36
      $region35: #{cbow_forward.1} parent=5 // pred_region
        %s239 = ssub.s32 %s15, 1
        %p240 = scmp.lt.s32.totalorder %s24, 1
        %s241 = scalar_select %p240, %s24, 1
        %s242 = smul.addr %s241, 8
        %s243 = scalar_lea.vmem %s0, %s242
        %p244 = pneg %p53
        %p245 = pneg %p50
        %s246 = smul.u32 16, %s25
        %p247 = scmp.lt.s32.totalorder %s246, 63
        %s248 = scalar_select %p247, %s246, 63
        %s249 = smul.addr %s248, 8
        %s250 = scalar_lea.vmem %s1, %s249
        %p251 = pneg %p79
        %p252 = pneg %p76
        %p253 = scmp.lt.s32.totalorder %s25, 3
        %s254 = scalar_select %p253, %s25, 3
        %s255 = scalar_lea.vmem %s2, %s254
        %p256 = pneg %p105
        %p257 = pneg %p102
        %p258 = scmp.lt.s32.totalorder %s24, 1
        %s259 = scalar_select %p258, %s24, 1
        %s260 = smul.addr %s259, 8
        %s261 = scalar_lea.vmem %s3, %s260
        %p262 = pneg %p131
        %p263 = pneg %p128
        %p264 = pneg %p159
        %p265 = pneg %p156
        %s266 = sand.u32 %s146, 1
        %s267 = scalar_lea.sflag [#allocation6], %s266
        %s268 = sand.u32 %s146, 1
        %s269 = smul.addr %s268, 8
        %s270 = scalar_lea.vmem [#allocation5], %s269
        %p271 = pneg %p185
        %p272 = pneg %p182
        %p273 = scmp.lt.s32.totalorder %s24, 1
        %s274 = scalar_select %p273, %s24, 1
        %s275 = smul.addr %s274, 8
        %s276 = scalar_lea.vmem %s5, %s275
        %p277 = scmp.lt.s32.totalorder %s24, 1
        %s278 = scalar_select %p277, %s24, 1
        %s279 = smul.addr %s278, 8
        %s280 = scalar_lea.vmem %s0, %s279
        %s281 = smul.u32 16, %s25
        %p282 = scmp.lt.s32.totalorder %s281, 63
        %s283 = scalar_select %p282, %s281, 63
        %s284 = smul.addr %s283, 8
        %s285 = scalar_lea.vmem %s1, %s284
        %s286 = smul.u32 16, %s25
        %p287 = scmp.lt.s32.totalorder %s25, 3
        %s288 = scalar_select %p287, %s25, 3
        %s289 = scalar_lea.vmem %s2, %s288
        %p290 = scmp.lt.s32.totalorder %s24, 1
        %s291 = scalar_select %p290, %s24, 1
        %s292 = smul.addr %s291, 8
        %s293 = scalar_lea.vmem %s3, %s292
        %p294 = scmp.lt.s32.totalorder %s24, 1
        %s295 = scalar_select %p294, %s24, 1
        %s296 = smul.addr %s295, 8
        %s297 = scalar_lea.vmem %s5, %s296
        %v298 = vld [vmem:[%s280] sm:$0xff]
        %v299 = vld [vmem:[%s285] sm:$0xff]
        %v300 = vld [vmem:[%s285 + $0x8] sm:$0xff]
        %v301 = vld [vmem:[%s285 + $0x10] sm:$0xff]
        %v302 = vld [vmem:[%s285 + $0x18] sm:$0xff]
        %v303 = vld [vmem:[%s285 + $0x20] sm:$0xff]
        %v304 = vld [vmem:[%s285 + $0x28] sm:$0xff]
        %v305 = vld [vmem:[%s285 + $0x30] sm:$0xff]
        %v306 = vld [vmem:[%s285 + $0x38] sm:$0xff]
        %v307 = vld [vmem:[%s285 + $0x40] sm:$0xff]
        %v308 = vld [vmem:[%s285 + $0x48] sm:$0xff]
        %v309 = vld [vmem:[%s285 + $0x50] sm:$0xff]
        %v310 = vld [vmem:[%s285 + $0x58] sm:$0xff]
        %v311 = vld [vmem:[%s285 + $0x60] sm:$0xff]
        %v312 = vld [vmem:[%s285 + $0x68] sm:$0xff]
        %v313 = vld [vmem:[%s285 + $0x70] sm:$0xff]
        %v314 = vld [vmem:[%s285 + $0x78] sm:$0xff]
        %v315 = vld [vmem:[%s289] sm:$0x1]
        %v317 = vperm.slane %v315, 0
        %vm319 = vcmask 261120
        %v321 = vsel %vm319, %v298, 0
        %v324 = vsel %vm319, %v299, 0
        %v327 = vsel %vm319, %v300, 0
        %v330 = vsel %vm319, %v301, 0
        %v333 = vsel %vm319, %v302, 0
        %v336 = vsel %vm319, %v303, 0
        %v339 = vsel %vm319, %v304, 0
        %v342 = vsel %vm319, %v305, 0
        %v345 = vsel %vm319, %v306, 0
        %v348 = vsel %vm319, %v307, 0
        %v351 = vsel %vm319, %v308, 0
        %v354 = vsel %vm319, %v309, 0
        %v357 = vsel %vm319, %v310, 0
        %v360 = vsel %vm319, %v311, 0
        %v363 = vsel %vm319, %v312, 0
        %v366 = vsel %vm319, %v313, 0
        %v369 = vsel %vm319, %v314, 0
        %371 = vmatpush.xpose.msra.mxu0 %v369
        %372 = vmatpush.xpose.msra.mxu0 %v366
        %373 = vmatpush.xpose.msra.mxu0 %v363
        %374 = vmatpush.xpose.msra.mxu0 %v360
        %375 = vmatpush.xpose.msra.mxu0 %v357
        %376 = vmatpush.xpose.msra.mxu0 %v354
        %377 = vmatpush.xpose.msra.mxu0 %v351
        %378 = vmatpush.xpose.msra.mxu0 %v348
        %379 = vmatpush.xpose.msra.mxu0 %v345
        %380 = vmatpush.xpose.msra.mxu0 %v342
        %381 = vmatpush.xpose.msra.mxu0 %v339
        %382 = vmatpush.xpose.msra.mxu0 %v336
        %383 = vmatpush.xpose.msra.mxu0 %v333
        %384 = vmatpush.xpose.msra.mxu0 %v330
        %385 = vmatpush.xpose.msra.mxu0 %v327
        %386 = vmatpush.xpose.msra.mxu0 %v324
        %387 = vmatmul.f32.gmra.mxu0 %v321
        %v388 = vpop.f32.mrf.mxu0
        %v389 = vadd.f32 %v317, %v388
        %390 = vdwg.mxu0
        %391 = vst [vmem:[%s270] sm:$0xff] %v389
        %p392 = scmp.eq.s32.totalorder %s25, 0
        // Predicated region
        $region37: #{cbow_forward.1} parent=35 // pred_check
          %p393 = pneg %p392
        $region38: #{cbow_forward.1} parent=35 // pred_check_branch
          %395 = sbr.rel (%p393) target = $region40
        $region39: #{cbow_forward.1} parent=35 // pred_region
          %vm396 = vcmask 7168
          %397 = vst.msk [vmem:[#allocation2] sm:$0xff] %vm396, -inf
          %398 = vst.msk [vmem:[#allocation3] sm:$0xff] %vm396, 0.0
          %399 = vst.msk [vmem:[#allocation4] sm:$0xff] %vm396, 0.0
        $region40: #{cbow_forward.1} parent=35 // pred_fallthru
          _
        %v400 = vlaneseq
        %v401 = vand.u32 %v400, 127
        %v402 = vld [vmem:[#allocation2] sm:$0xff]
        %403 = vmax.xlane.f32.xlu0 %v389
        %v404 = vpop.xlane.xlu0 %403
        %v405 = vmax.f32 %v402, %v404
        %v406 = vsub.f32 %v402, %v405
        %v407 = vmul.f32 %v406, 1.442695
        %v408 = vpow.pop %v407
        %v409 = vld [vmem:[#allocation3] sm:$0xff]
        %v410 = vmul.f32 %v408, %v409
        %412 = vset.pattern.permute.xlu0 0
        %413 = vperm.xlu0 %412, %v405
        %v414 = vpop.permute.xlu0 %413
        %v416 = vsub.f32 %v389, %v414
        %v417 = vmul.f32 %v416, 1.442695
        %v418 = vpow.pop %v417
        %419 = vadd.xlane.f32.xlu0 %v418
        %v420 = vpop.xlane.xlu0 %419
        %v421 = vadd.f32 %v410, %v420
        %vm422 = vcmask 7168
        %423 = vst.msk [vmem:[#allocation3] sm:$0xff] %vm422, %v421
        %424 = vst.msk [vmem:[#allocation2] sm:$0xff] %vm422, %v405
        %v425 = vld [vmem:[%s293] sm:$0xff]
        %s426 = smul.u32 %s25, 128
        %v427 = vstv %s426
        %v428 = vsub.s32 %v425, %v427
        %v429 = vld [vmem:[#allocation4] sm:$0xff]
        %430 = vset.pattern.permute.xlu0 0
        %431 = vperm.xlu0 %430, %v428
        %v432 = vpop.permute.xlu0 %431
        %vm433 = vcmp.eq.s32.totalorder %v401, %v432
        %v434 = vsel %vm433, %v389, 0.0
        %435 = vadd.xlane.f32.xlu0 %v434
        %v436 = vpop.xlane.xlu0 %435
        %v437 = vadd.f32 %v429, %v436
        %438 = vst.msk [vmem:[#allocation4] sm:$0xff] %vm422, %v437
        %p439 = scmp.eq.s32.totalorder %s25, 3
        // Predicated region
        $region41: #{cbow_forward.1} parent=35 // pred_check
          %p440 = pneg %p439
        $region42: #{cbow_forward.1} parent=35 // pred_check_branch
          %442 = sbr.rel (%p440) target = $region44
        $region43: #{cbow_forward.1} parent=35 // pred_region
          %v443 = vld [vmem:[#allocation2] sm:$0xff]
          %v444 = vld [vmem:[#allocation3] sm:$0xff]
          %v445 = vlog2.pop %v444
          %v446 = vmul.f32 %v445, 0.6931472
          %v447 = vadd.f32 %v443, %v446
          %v448 = vld [vmem:[#allocation4] sm:$0xff]
          %v449 = vsub.f32 %v447, %v448
          %450 = vst.msk [vmem:[%s297] sm:$0xff] %vm422, %v449
        $region44: #{cbow_forward.1} parent=35 // pred_fallthru
          _
        %s451 = sand.u32 %s146, 1
        %s452 = scalar_lea.sflag [#allocation6], %s451
        %s453 = sand.u32 %s146, 1
        %s454 = smul.addr %s453, 8
        %s455 = scalar_lea.vmem [#allocation5], %s454
        %p456 = scmp.lt.s32.totalorder %s24, 1
        %s457 = scalar_select %p456, %s24, 1
        %s458 = smul.addr %s457, 8
        %s459 = scalar_lea.vmem %s5, %s458
        // Predicated region
        $region45: #{cbow_forward.1} parent=35 // pred_check
          %p460 = pneg %p156
        $region46: #{cbow_forward.1} parent=35 // pred_check_branch
          %462 = sbr.rel (%p460) target = $region48
        $region47: #{cbow_forward.1} parent=35 // pred_region
          %464 = vsyncadd %s452, 0
          %s465 = smul.addr %s24, 4
          %s466 = sadd.s32 %s25, %s465
          %s467 = smul.addr %s466, 8
          %s468 = scalar_lea.hbm %s4, %s467
          %s470 = sshll.u32 %s455, 4
          %s471 = int_to_ptr.vmem [resolvable:$true] %s470
          %s472 = sshll.u32 %s468, 4
          %s473 = int_to_ptr.hbm [resolvable:$true] %s472
          %475 = dma.vmem_to_hbm [thread:$0]  %s471, 128, %s473, %s452
        $region48: #{cbow_forward.1} parent=35 // pred_fallthru
          _
        // Predicated region
        $region49: #{cbow_forward.1} parent=35 // pred_check
          %p476 = pneg %p182
        $region50: #{cbow_forward.1} parent=35 // pred_check_branch
          %478 = sbr.rel (%p476) target = $region52
        $region51: #{cbow_forward.1} parent=35 // pred_region
          _
        $region52: #{cbow_forward.1} parent=35 // pred_fallthru
          _
      $region36: #{cbow_forward.1} parent=5 // pred_fallthru
        _
      %p479 = scmp.le.s32.totalorder 2, %s15
      // Predicated region
      $region53: #{cbow_forward.1} parent=5 // pred_check
        %p480 = pneg %p479
      $region54: #{cbow_forward.1} parent=5 // pred_check_branch
        %482 = sbr.rel (%p480) target = $region56
      $region55: #{cbow_forward.1} parent=5 // pred_region
        %s483 = ssub.s32 %s15, 2
        // Predicated region
        $region57: #{cbow_forward.1} parent=55 // pred_check
          %p484 = pneg %p162
        $region58: #{cbow_forward.1} parent=55 // pred_check_branch
          %486 = sbr.rel (%p484) target = $region60
        $region59: #{cbow_forward.1} parent=55 // pred_region
          %s487 = sand.u32 %s147, 1
          %s488 = scalar_lea.sflag [#allocation6], %s487
          %s489 = sand.u32 %s147, 1
          %s490 = smul.addr %s489, 8
          %s491 = scalar_lea.vmem [#allocation5], %s490
          %493 = dma.done %s488, 128
        $region60: #{cbow_forward.1} parent=55 // pred_fallthru
          _
        // Predicated region
        $region61: #{cbow_forward.1} parent=55 // pred_check
          %p494 = pneg %p188
        $region62: #{cbow_forward.1} parent=55 // pred_check_branch
          %496 = sbr.rel (%p494) target = $region64
        $region63: #{cbow_forward.1} parent=55 // pred_region
          %p497 = scmp.lt.s32.totalorder %s26, 1
          %s498 = scalar_select %p497, %s26, 1
          %s499 = smul.addr %s498, 8
          %s500 = scalar_lea.vmem %s5, %s499
        $region64: #{cbow_forward.1} parent=55 // pred_fallthru
          _
      $region56: #{cbow_forward.1} parent=5 // pred_fallthru
        _
    $region6: #{cbow_forward.1} parent=1 // loop_footer
      %s19 = sadd.s32 1, %s15
    $region7: #{cbow_forward.1} parent=1 // loop_footer_branch
      %14 = sbr.rel target = $region3
    $region8: #{cbow_forward.1} parent=1 // loop_exit
      _
    %501 = vsyncpa [#allocation6], 1
    %s502 = scalar_lea.sflag [#allocation6], 1
    %503 = vsyncpa %s502, 1

</llo_original>
